<compile_context>
chip_gen: v5e
topology: v5e:2x2
jax: 0.10.0
libtpu: 0.0.40
codegen_flags: <defaults>
</compile_context>

<pallas_src>
import jax
import jax.numpy as jnp
import numpy as np
from jax.experimental import pallas as pl
from jax.experimental.pallas import tpu as pltpu


# ----------------------------------------------------------------------------
# Kernel
# ----------------------------------------------------------------------------
def _lama_critic_kernel(s_ref, a_ref, w_obs_ref, w_act_ref, wstack_ref,
                        bias_ref, out_ref):
    rows = s_ref.shape[0]          # block_b * ln
    block_b = a_ref.shape[0]
    ln = rows // block_b
    F = w_obs_ref.shape[-1]        # lane-dense padded feature width

    biases = bias_ref[...]                                   # (4, F) f32
    b_obs, b_feat, b_f2, b_val = (biases[0:1], biases[1:2],
                                  biases[2:3], biases[3:4])

    # --- observation_net: Linear(state_size -> h0) + ReLU (bf16 MXU, f32 acc)
    h = jnp.dot(s_ref[...], w_obs_ref[...],
                preferred_element_type=jnp.float32)          # (rows, F)
    h = jnp.maximum(h + b_obs, 0.0)

    # --- feature_net: Linear(h0 + action -> h1) + ReLU.  The concat is split
    # into two dots; the action term is computed once per batch row and
    # broadcast over the sequence.
    a_feat = jnp.dot(a_ref[...], w_act_ref[...],
                     preferred_element_type=jnp.float32)     # (block_b, F)
    x = jnp.dot(h.astype(jnp.bfloat16), wstack_ref[0],
                preferred_element_type=jnp.float32)          # (rows, F)
    x = x.reshape(block_b, ln, F)
    x = jnp.maximum(x + a_feat[:, None, :] + b_feat, 0.0)    # (block_b, ln, F)

    # --- time-axis pooling: last / mean / max.  The attention pooling of the
    # original module equals the mean (softmax over a singleton axis == 1);
    # its weight chunk was folded into the avg chunk in the wrapper.
    x_last = x[:, ln - 1, :]                                 # (block_b, F)
    x_avg = jnp.sum(x, axis=1) * (1.0 / ln)                  # (block_b, F)
    x_max = jnp.max(x, axis=1)                               # (block_b, F)

    # --- feature_net2: Linear(4*h1 -> h1) + ReLU as accumulated dots on the
    # pre-split (and zero-padded) weight chunks.
    y = jnp.dot(x_last.astype(jnp.bfloat16), wstack_ref[1],
                preferred_element_type=jnp.float32)
    y = y + jnp.dot(x_avg.astype(jnp.bfloat16), wstack_ref[2],
                    preferred_element_type=jnp.float32)
    y = y + jnp.dot(x_max.astype(jnp.bfloat16), wstack_ref[3],
                    preferred_element_type=jnp.float32)
    y = jnp.maximum(y + b_f2, 0.0)                           # (block_b, F)

    # --- value_net: Linear(h1 -> n_atoms) (n_atoms zero-padded to F lanes so
    # the store is lane-dense / unmasked; wrapper slices the valid columns).
    out = jnp.dot(y.astype(jnp.bfloat16), wstack_ref[4],
                  preferred_element_type=jnp.float32)
    out_ref[...] = out + b_val                               # (block_b, F)


# ----------------------------------------------------------------------------
# Wrapper (pure glue: reshapes, dtype casts, parameter packing, pallas_call)
# ----------------------------------------------------------------------------
def _round_up(x, m):
    return ((x + m - 1) // m) * m


def _pick_block_b(bs, ln, max_rows=512):
    """Batches per grid step: multiple of 8 dividing bs, <= max_rows matmul rows."""
    if bs % 8 != 0:
        return bs                       # single block; block dims == array dims
    b = 8
    while bs % (2 * b) == 0 and (2 * b) * ln <= max_rows:
        b *= 2
    return b


def lama_critic_forward(states, action, params, *, block_b=None):
    """states: (bs, ln, state_size) [or (bs, state_size)]; action: (bs, action_size)."""
    if states.ndim < 3:
        states = states[:, None, :]
    bs, ln, sd = states.shape
    ad = action.shape[-1]

    (w_obs, b_obs, w_feat, b_feat, _w_attn, _b_attn,
     w_f2, b_f2, w_val, b_val) = params
    h0 = w_obs.shape[-1]
    h1 = w_feat.shape[-1]
    n_atoms = w_val.shape[-1]

    # Lane-dense padded feature width shared by all hidden dims + n_atoms so
    # the square weights can be stacked into a single kernel input.
    F = _round_up(max(h0, h1, n_atoms, 128), 128)

    def pad2(w, rows, cols):  # zero-pad a 2D weight to (rows, cols), f32
        w = w.astype(jnp.float32)
        return jnp.pad(w, ((0, rows - w.shape[0]), (0, cols - w.shape[1])))

    # ---- parameter packing (one-time cost; constant-folded under jit) -------
    w_obs_p = pad2(w_obs, sd, F).astype(jnp.bfloat16)            # (sd, F)
    w_feat_h = pad2(w_feat[:h0], F, F)                           # (F, F)
    w_feat_a = pad2(w_feat[h0:], ad, F).astype(jnp.bfloat16)     # (ad, F)
    # feature_net2 weight split by pooling source (last/avg/max/attn); the
    # attn chunk is folded into the avg chunk since x_attn == x_avg exactly.
    w_f2_last = pad2(w_f2[0:h1], F, F)
    w_f2_avg = pad2(w_f2[h1:2 * h1] + w_f2[3 * h1:4 * h1], F, F)
    w_f2_max = pad2(w_f2[2 * h1:3 * h1], F, F)
    w_val_p = pad2(w_val, F, F)
    wstack = jnp.stack([w_feat_h, w_f2_last, w_f2_avg, w_f2_max, w_val_p]
                       ).astype(jnp.bfloat16)                    # (5, F, F)
    bstack = jnp.concatenate([pad2(b_obs, 1, F), pad2(b_feat, 1, F),
                              pad2(b_f2, 1, F), pad2(b_val, 1, F)],
                             axis=0)                             # (4, F) f32

    # ---- activations: flatten time into matmul rows; actions stay (bs, ad) --
    s2 = states.reshape(bs * ln, sd).astype(jnp.bfloat16)
    a2 = action.astype(jnp.bfloat16)

    if block_b is None:
        block_b = _pick_block_b(bs, ln)
    assert bs % block_b == 0 and (block_b == bs or block_b % 8 == 0), \
        "block_b must divide bs and be a multiple of 8 (or equal bs)"
    grid = (bs // block_b,)
    rows_blk = block_b * ln

    # NOTE: at these sizes everything fits the default scoped-VMEM budget on
    # v5e/v6e/v7x; for much larger block_b*ln, set
    # pltpu.CompilerParams(vmem_limit_bytes=...) and re-derive the tile for
    # v7x's 64 MiB physical VMEM.
    out_padded = pl.pallas_call(
        _lama_critic_kernel,
        out_shape=jax.ShapeDtypeStruct((bs, F), jnp.float32),
        grid=grid,
        in_specs=[
            pl.BlockSpec((rows_blk, sd), lambda i: (i, 0)),      # state rows
            pl.BlockSpec((block_b, ad), lambda i: (i, 0)),       # actions
            pl.BlockSpec((sd, F), lambda i: (0, 0)),             # w_obs (resident)
            pl.BlockSpec((ad, F), lambda i: (0, 0)),             # w_feat_action
            pl.BlockSpec((5, F, F), lambda i: (0, 0, 0)),        # stacked weights
            pl.BlockSpec((4, F), lambda i: (0, 0)),              # stacked biases
        ],
        out_specs=pl.BlockSpec((block_b, F), lambda i: (i, 0)),
        compiler_params=pltpu.CompilerParams(
            dimension_semantics=("parallel",)),
    )(s2, a2, w_obs_p, w_feat_a, wstack, bstack)

    return out_padded[:, :n_atoms]


# ----------------------------------------------------------------------------
# Parameters and pure-JAX reference (mirrors the PyTorch forward, incl. the
# no-op softmax attention branch, in f32)
# ----------------------------------------------------------------------------
def make_params(key, state_size, action_size, hiddens, n_atoms):
    """Deterministic synthetic parameter init (same shapes as the PyTorch module)."""
    h0, h1 = hiddens
    ks = jax.random.split(key, 10)
    scale = 0.1
    w_obs = scale * jax.random.normal(ks[0], (state_size, h0), jnp.float32)
    b_obs = scale * jax.random.normal(ks[1], (1, h0), jnp.float32)
    w_feat = scale * jax.random.normal(ks[2], (h0 + action_size, h1), jnp.float32)
    b_feat = scale * jax.random.normal(ks[3], (1, h1), jnp.float32)
    w_attn = scale * jax.random.normal(ks[4], (h1, 1), jnp.float32)   # Conv1d(h1,1,1)
    b_attn = scale * jax.random.normal(ks[5], (1, 1), jnp.float32)
    w_f2 = scale * jax.random.normal(ks[6], (h1 * 4, h1), jnp.float32)
    b_f2 = scale * jax.random.normal(ks[7], (1, h1), jnp.float32)
    w_val = scale * jax.random.normal(ks[8], (h1, n_atoms), jnp.float32)
    b_val = scale * jax.random.normal(ks[9], (1, n_atoms), jnp.float32)
    return (w_obs, b_obs, w_feat, b_feat, w_attn, b_attn,
            w_f2, b_f2, w_val, b_val)


def reference_forward(states, action, params):
    """Pure-JAX f32 reference mirroring the PyTorch forward exactly."""
    (w_obs, b_obs, w_feat, b_feat, w_attn, b_attn,
     w_f2, b_f2, w_val, b_val) = params
    bs, ln, _ = states.shape
    h = jax.nn.relu(states @ w_obs + b_obs)                       # (bs, ln, h0)
    a = jnp.broadcast_to(action[:, None, :], (bs, ln, action.shape[-1]))
    x = jnp.concatenate([h, a], axis=-1)
    x = jax.nn.relu(x @ w_feat + b_feat)                          # (bs, ln, h1)
    logits = x @ w_attn + b_attn                                  # (bs, ln, 1)
    attn = jax.nn.softmax(logits, axis=2)                         # singleton -> 1
    x_attn = jnp.mean(attn * x, axis=1, keepdims=True)
    x_avg = jnp.mean(x, axis=1, keepdims=True)
    x_max = jnp.max(x, axis=1, keepdims=True)
    x_last = x[:, -1:, :]
    cat = jnp.concatenate([x_last, x_avg, x_max, x_attn], axis=1).reshape(bs, -1)
    y = jax.nn.relu(cat @ w_f2 + b_f2)
    return y @ w_val + b_val


# ----------------------------------------------------------------------------
if __name__ == "__main__":
    state_size = 16
    action_size = 4
    hiddens = [32, 32]      # concat_at = 1
    n_atoms = 1

    key = jax.random.PRNGKey(0)
    k_s, k_a, k_p, k_s2, k_a2 = jax.random.split(key, 5)
    params = make_params(k_p, state_size, action_size, hiddens, n_atoms)

    # Main check: bs=16, ln=8 with block_b=8 -> grid=(2,), exercises the
    # batch-parallel, weight-resident pipeline path.
    bs, ln = 16, 8
    states = jax.random.normal(k_s, (bs, ln, state_size), jnp.float32)
    action = jax.random.normal(k_a, (bs, action_size), jnp.float32)

    out = jax.block_until_ready(lama_critic_forward(states, action, params,
                                                    block_b=8))
    ref = reference_forward(states, action, params)
    assert out.shape == (bs, n_atoms)
    np.testing.assert_allclose(np.asarray(out), np.asarray(ref),
                               rtol=2e-2, atol=2e-2)

    # Tiny-batch check: bs=2 -> single block (block dims == full array dims).
    bs2, ln2 = 2, 8
    states2 = jax.random.normal(k_s2, (bs2, ln2, state_size), jnp.float32)
    action2 = jax.random.normal(k_a2, (bs2, action_size), jnp.float32)
    out2 = jax.block_until_ready(lama_critic_forward(states2, action2, params))
    ref2 = reference_forward(states2, action2, params)
    assert out2.shape == (bs2, n_atoms)
    np.testing.assert_allclose(np.asarray(out2), np.asarray(ref2),
                               rtol=2e-2, atol=2e-2)

    print("KERNEL_OK")
</pallas_src>

<mosaic_0001>
module attributes {stable_mosaic.version = 11 : i64} {
  func.func @_lama_critic_kernel(%arg0: i32, %arg1: memref<64x16xbf16, #tpu.memory_space<vmem>>, %arg2: memref<8x4xbf16, #tpu.memory_space<vmem>>, %arg3: memref<16x128xbf16, #tpu.memory_space<vmem>>, %arg4: memref<4x128xbf16, #tpu.memory_space<vmem>>, %arg5: memref<5x128x128xbf16, #tpu.memory_space<vmem>>, %arg6: memref<4x128xf32, #tpu.memory_space<vmem>>, %arg7: memref<8x128xf32, #tpu.memory_space<vmem>>) attributes {dimension_semantics = [#tpu.dimension_semantics<parallel>], iteration_bounds = array<i64: 2>, scalar_prefetch = 0 : i64, scratch_operands = 0 : i64, tpu.core_type = #tpu.core_type<tc>, window_params = [{transform_indices = @transform_0, window_bounds = array<i64: 64, 16>}, {transform_indices = @transform_1, window_bounds = array<i64: 8, 4>}, {pipeline_mode = #tpu.pipeline_mode<synchronous>, transform_indices = @transform_2, window_bounds = array<i64: 16, 128>}, {pipeline_mode = #tpu.pipeline_mode<synchronous>, transform_indices = @transform_3, window_bounds = array<i64: 4, 128>}, {pipeline_mode = #tpu.pipeline_mode<synchronous>, transform_indices = @transform_4, window_bounds = array<i64: 5, 128, 128>}, {pipeline_mode = #tpu.pipeline_mode<synchronous>, transform_indices = @transform_5, window_bounds = array<i64: 4, 128>}, {transform_indices = @transform_6, window_bounds = array<i64: 8, 128>}]} {
    %c0 = arith.constant 0 : index
    %c0_0 = arith.constant 0 : index
    %0 = vector.load %arg6[%c0, %c0_0] : memref<4x128xf32, #tpu.memory_space<vmem>>, vector<4x128xf32>
    %1 = vector.extract_strided_slice %0 {offsets = [0, 0], sizes = [1, 128], strides = [1, 1]} : vector<4x128xf32> to vector<1x128xf32>
    %2 = vector.extract_strided_slice %0 {offsets = [1, 0], sizes = [1, 128], strides = [1, 1]} : vector<4x128xf32> to vector<1x128xf32>
    %3 = vector.extract_strided_slice %0 {offsets = [2, 0], sizes = [1, 128], strides = [1, 1]} : vector<4x128xf32> to vector<1x128xf32>
    %4 = vector.extract_strided_slice %0 {offsets = [3, 0], sizes = [1, 128], strides = [1, 1]} : vector<4x128xf32> to vector<1x128xf32>
    %c0_1 = arith.constant 0 : index
    %c0_2 = arith.constant 0 : index
    %5 = vector.load %arg1[%c0_1, %c0_2] : memref<64x16xbf16, #tpu.memory_space<vmem>>, vector<64x16xbf16>
    %c0_3 = arith.constant 0 : index
    %c0_4 = arith.constant 0 : index
    %6 = vector.load %arg3[%c0_3, %c0_4] : memref<16x128xbf16, #tpu.memory_space<vmem>>, vector<16x128xbf16>
    %cst = arith.constant dense<0.000000e+00> : vector<64x128xf32>
    %7 = tpu.matmul %5, %6, %cst {dimension_numbers = #tpu.dot_dimension_numbers<[1], [0], [0], [1], [0, 0, 1, 1], [], []>} : vector<64x16xbf16>, vector<16x128xbf16>, vector<64x128xf32> -> vector<64x128xf32>
    %8 = vector.broadcast %1 : vector<1x128xf32> to vector<64x128xf32>
    %9 = arith.addf %7, %8 : vector<64x128xf32>
    %cst_5 = arith.constant 0.000000e+00 : f32
    %10 = vector.broadcast %cst_5 : f32 to vector<64x128xf32>
    %11 = arith.maximumf %9, %10 : vector<64x128xf32>
    %c0_6 = arith.constant 0 : index
    %c0_7 = arith.constant 0 : index
    %12 = vector.load %arg2[%c0_6, %c0_7] : memref<8x4xbf16, #tpu.memory_space<vmem>>, vector<8x4xbf16>
    %c0_8 = arith.constant 0 : index
    %c0_9 = arith.constant 0 : index
    %13 = vector.load %arg4[%c0_8, %c0_9] : memref<4x128xbf16, #tpu.memory_space<vmem>>, vector<4x128xbf16>
    %cst_10 = arith.constant dense<0.000000e+00> : vector<8x128xf32>
    %14 = tpu.matmul %12, %13, %cst_10 {dimension_numbers = #tpu.dot_dimension_numbers<[1], [0], [0], [1], [0, 0, 1, 1], [], []>} : vector<8x4xbf16>, vector<4x128xbf16>, vector<8x128xf32> -> vector<8x128xf32>
    %15 = arith.truncf %11 : vector<64x128xf32> to vector<64x128xbf16>
    %c0_11 = arith.constant 0 : index
    %c0_12 = arith.constant 0 : index
    %c0_13 = arith.constant 0 : index
    %16 = vector.load %arg5[%c0_11, %c0_12, %c0_13] : memref<5x128x128xbf16, #tpu.memory_space<vmem>>, vector<1x128x128xbf16>
    %17 = vector.shape_cast %16 : vector<1x128x128xbf16> to vector<128x128xbf16>
    %cst_14 = arith.constant dense<0.000000e+00> : vector<64x128xf32>
    %18 = tpu.matmul %15, %17, %cst_14 {dimension_numbers = #tpu.dot_dimension_numbers<[1], [0], [0], [1], [0, 0, 1, 1], [], []>} : vector<64x128xbf16>, vector<128x128xbf16>, vector<64x128xf32> -> vector<64x128xf32>
    %19 = vector.shape_cast %18 : vector<64x128xf32> to vector<8x8x128xf32>
    %20 = vector.shape_cast %14 : vector<8x128xf32> to vector<8x1x128xf32>
    %21 = vector.broadcast %20 : vector<8x1x128xf32> to vector<8x8x128xf32>
    %22 = arith.addf %19, %21 : vector<8x8x128xf32>
    %23 = vector.shape_cast %2 : vector<1x128xf32> to vector<1x1x128xf32>
    %24 = vector.broadcast %23 : vector<1x1x128xf32> to vector<8x8x128xf32>
    %25 = arith.addf %22, %24 : vector<8x8x128xf32>
    %cst_15 = arith.constant 0.000000e+00 : f32
    %26 = vector.broadcast %cst_15 : f32 to vector<8x8x128xf32>
    %27 = arith.maximumf %25, %26 : vector<8x8x128xf32>
    %28 = vector.extract_strided_slice %27 {offsets = [0, 7, 0], sizes = [8, 1, 128], strides = [1, 1, 1]} : vector<8x8x128xf32> to vector<8x1x128xf32>
    %29 = vector.shape_cast %28 : vector<8x1x128xf32> to vector<8x128xf32>
    %cst_16 = arith.constant dense<0.000000e+00> : vector<8x128xf32>
    %30 = vector.multi_reduction <add>, %27, %cst_16 [1] : vector<8x8x128xf32> to vector<8x128xf32>
    %cst_17 = arith.constant 1.250000e-01 : f32
    %31 = vector.broadcast %cst_17 : f32 to vector<8x128xf32>
    %32 = arith.mulf %30, %31 : vector<8x128xf32>
    %cst_18 = arith.constant dense<0xFF800000> : vector<8x128xf32>
    %33 = vector.multi_reduction <maximumf>, %27, %cst_18 [1] : vector<8x8x128xf32> to vector<8x128xf32>
    %34 = arith.truncf %29 : vector<8x128xf32> to vector<8x128xbf16>
    %c1 = arith.constant 1 : index
    %c0_19 = arith.constant 0 : index
    %c0_20 = arith.constant 0 : index
    %35 = vector.load %arg5[%c1, %c0_19, %c0_20] : memref<5x128x128xbf16, #tpu.memory_space<vmem>>, vector<1x128x128xbf16>
    %36 = vector.shape_cast %35 : vector<1x128x128xbf16> to vector<128x128xbf16>
    %cst_21 = arith.constant dense<0.000000e+00> : vector<8x128xf32>
    %37 = tpu.matmul %34, %36, %cst_21 {dimension_numbers = #tpu.dot_dimension_numbers<[1], [0], [0], [1], [0, 0, 1, 1], [], []>} : vector<8x128xbf16>, vector<128x128xbf16>, vector<8x128xf32> -> vector<8x128xf32>
    %38 = arith.truncf %32 : vector<8x128xf32> to vector<8x128xbf16>
    %c2 = arith.constant 2 : index
    %c0_22 = arith.constant 0 : index
    %c0_23 = arith.constant 0 : index
    %39 = vector.load %arg5[%c2, %c0_22, %c0_23] : memref<5x128x128xbf16, #tpu.memory_space<vmem>>, vector<1x128x128xbf16>
    %40 = vector.shape_cast %39 : vector<1x128x128xbf16> to vector<128x128xbf16>
    %cst_24 = arith.constant dense<0.000000e+00> : vector<8x128xf32>
    %41 = tpu.matmul %38, %40, %cst_24 {dimension_numbers = #tpu.dot_dimension_numbers<[1], [0], [0], [1], [0, 0, 1, 1], [], []>} : vector<8x128xbf16>, vector<128x128xbf16>, vector<8x128xf32> -> vector<8x128xf32>
    %42 = arith.addf %37, %41 : vector<8x128xf32>
    %43 = arith.truncf %33 : vector<8x128xf32> to vector<8x128xbf16>
    %c3 = arith.constant 3 : index
    %c0_25 = arith.constant 0 : index
    %c0_26 = arith.constant 0 : index
    %44 = vector.load %arg5[%c3, %c0_25, %c0_26] : memref<5x128x128xbf16, #tpu.memory_space<vmem>>, vector<1x128x128xbf16>
    %45 = vector.shape_cast %44 : vector<1x128x128xbf16> to vector<128x128xbf16>
    %cst_27 = arith.constant dense<0.000000e+00> : vector<8x128xf32>
    %46 = tpu.matmul %43, %45, %cst_27 {dimension_numbers = #tpu.dot_dimension_numbers<[1], [0], [0], [1], [0, 0, 1, 1], [], []>} : vector<8x128xbf16>, vector<128x128xbf16>, vector<8x128xf32> -> vector<8x128xf32>
    %47 = arith.addf %42, %46 : vector<8x128xf32>
    %48 = vector.broadcast %3 : vector<1x128xf32> to vector<8x128xf32>
    %49 = arith.addf %47, %48 : vector<8x128xf32>
    %cst_28 = arith.constant 0.000000e+00 : f32
    %50 = vector.broadcast %cst_28 : f32 to vector<8x128xf32>
    %51 = arith.maximumf %49, %50 : vector<8x128xf32>
    %52 = arith.truncf %51 : vector<8x128xf32> to vector<8x128xbf16>
    %c4 = arith.constant 4 : index
    %c0_29 = arith.constant 0 : index
    %c0_30 = arith.constant 0 : index
    %53 = vector.load %arg5[%c4, %c0_29, %c0_30] : memref<5x128x128xbf16, #tpu.memory_space<vmem>>, vector<1x128x128xbf16>
    %54 = vector.shape_cast %53 : vector<1x128x128xbf16> to vector<128x128xbf16>
    %cst_31 = arith.constant dense<0.000000e+00> : vector<8x128xf32>
    %55 = tpu.matmul %52, %54, %cst_31 {dimension_numbers = #tpu.dot_dimension_numbers<[1], [0], [0], [1], [0, 0, 1, 1], [], []>} : vector<8x128xbf16>, vector<128x128xbf16>, vector<8x128xf32> -> vector<8x128xf32>
    %56 = vector.broadcast %4 : vector<1x128xf32> to vector<8x128xf32>
    %57 = arith.addf %55, %56 : vector<8x128xf32>
    %c0_32 = arith.constant 0 : index
    %c0_33 = arith.constant 0 : index
    %58 = vector.load %arg7[%c0_32, %c0_33] : memref<8x128xf32, #tpu.memory_space<vmem>>, vector<8x128xf32>
    tpu.vector_store %arg7[%c0_32, %c0_33], %57 {strides = array<i32>} : memref<8x128xf32, #tpu.memory_space<vmem>>, vector<8x128xf32>,
    return
  }
  func.func @transform_0(%arg0: i32) -> (i32, i32) {
    %c0_i32 = arith.constant 0 : i32
    %c0_i32_0 = arith.constant 0 : i32
    return %arg0, %c0_i32 : i32, i32
  }
  func.func @transform_1(%arg0: i32) -> (i32, i32) {
    %c0_i32 = arith.constant 0 : i32
    %c0_i32_0 = arith.constant 0 : i32
    return %arg0, %c0_i32 : i32, i32
  }
  func.func @transform_2(%arg0: i32) -> (i32, i32) {
    %c0_i32 = arith.constant 0 : i32
    %c0_i32_0 = arith.constant 0 : i32
    %c0_i32_1 = arith.constant 0 : i32
    return %c0_i32, %c0_i32_0 : i32, i32
  }
  func.func @transform_3(%arg0: i32) -> (i32, i32) {
    %c0_i32 = arith.constant 0 : i32
    %c0_i32_0 = arith.constant 0 : i32
    %c0_i32_1 = arith.constant 0 : i32
    return %c0_i32, %c0_i32_0 : i32, i32
  }
  func.func @transform_4(%arg0: i32) -> (i32, i32, i32) {
    %c0_i32 = arith.constant 0 : i32
    %c0_i32_0 = arith.constant 0 : i32
    %c0_i32_1 = arith.constant 0 : i32
    %c0_i32_2 = arith.constant 0 : i32
    return %c0_i32, %c0_i32_0, %c0_i32_1 : i32, i32, i32
  }
  func.func @transform_5(%arg0: i32) -> (i32, i32) {
    %c0_i32 = arith.constant 0 : i32
    %c0_i32_0 = arith.constant 0 : i32
    %c0_i32_1 = arith.constant 0 : i32
    return %c0_i32, %c0_i32_0 : i32, i32
  }
  func.func @transform_6(%arg0: i32) -> (i32, i32) {
    %c0_i32 = arith.constant 0 : i32
    %c0_i32_0 = arith.constant 0 : i32
    return %arg0, %c0_i32 : i32, i32
  }
}

</mosaic_0001>

<llo_original>
// kernel: tpu_custom_call.1
$region0: #{tpu_custom_call.1}
  #allocation0 [shape = 'u32[]', space=smem, size = 0x4, offset = 0x4, fixed_abs, tag = 'smem constant byte address 0x4 - core index']
  #allocation1 [shape = 'u32[72,128]{1,0:T(1,128)}', space=vmem, size = 0x9000, scoped, tag = 'internal scratch']
  %s0 = inlined_call_operand.vmem [shape: bf16[128,16], index: 0, kind: input, shape index: {}]
  %s1 = inlined_call_operand.vmem [shape: bf16[16,4], index: 1, kind: input, shape index: {}]
  %s2 = inlined_call_operand.vmem [shape: bf16[16,128], index: 2, kind: input, shape index: {}]
  %s3 = inlined_call_operand.vmem [shape: bf16[4,128], index: 3, kind: input, shape index: {}]
  %s4 = inlined_call_operand.hbm [shape: bf16[5,128,128], index: 4, kind: input, shape index: {}]
  %s5 = inlined_call_operand.vmem [shape: f32[4,128], index: 5, kind: input, shape index: {}]
  %s6 = inlined_call_operand.hbm [shape: f32[16,128], index: 6, kind: output, shape index: {}]
  %s7 = sld [smem:[#allocation0]]
  $region61: #{tpu_custom_call.1} parent=0
    _
  %s9 = ssub.s32 1, %s7
  %s10 = scalar_select 0, %s9, %s7
  $region1: #{tpu_custom_call.1} parent=0
    #allocation2 [shape = 'u8[163840]{0}', space=vmem, size = 0x28000, scoped, tag = 'input window, operand 4, single buffered']
    #allocation3 [shape = 's32[2]{0}', space=sflag, size = 0x8, scoped, tag = 'scoped memory for tpu_custom_call.1']
    #allocation4 [shape = 's32[2]{0}', space=sflag, size = 0x8, scoped, tag = 'scoped memory for tpu_custom_call.1']
    #allocation5 [shape = 'u8[8192]{0}', space=vmem, size = 0x2000, scoped, tag = 'output window, operand 0']
    %11 = vsyncpa [#allocation3], 0
    %12 = vsyncpa [#allocation4], 0
    %s13 = scalar_lea.sflag [#allocation4], 1
    %14 = vsyncpa %s13, 0
    loop: start=0, step=1, limit=4
    $region2: #{tpu_custom_call.1} parent=1 // loop_pre_header
      _
    $region3: #{tpu_custom_call.1} parent=1 // loop_header
      %s16 = sphi 0, %s20
      %p17 = scmp.ge.s32.totalorder %s16, 4
      %s26 = sphi 0, %s28
      %s29 = sphi 0, %s26
      %s30 = sphi 0, %s29
      %s46 = sphi 0, %s30
      %s52 = sphi 0, %s54
      %s55 = sphi 0, %s52
      %s56 = sphi 0, %s55
      %s72 = sphi 0, %s56
      %s76 = sphi 0, %s76
      %s78 = sphi 0, %s76
      %s79 = sphi 0, %s78
      %s93 = sphi 0, %s79
      %s97 = sphi 0, %s97
      %s99 = sphi 0, %s97
      %s100 = sphi 0, %s99
      %s114 = sphi 0, %s100
      %s118 = sphi 0, %s118
      %s120 = sphi 0, %s118
      %s121 = sphi 0, %s120
      %s135 = sphi 0, %s121
      %s139 = sphi 0, %s139
      %s141 = sphi 0, %s139
      %s142 = sphi 0, %s141
      %s156 = sphi 0, %s142
      %s162 = sphi 0, %s164
      %s165 = sphi 0, %s162
      %s166 = sphi 0, %s165
      %s182 = sphi 0, %s166
    $region4: #{tpu_custom_call.1} parent=1 // loop_header_branch
      %19 = sbr.rel (%p17) target = $region8
    $region5: #{tpu_custom_call.1} parent=1 // loop_body
      %s21 = ssub.s32 %s16, 1
      %s22 = ssub.s32 %s16, 2
      %s23 = sadd.s32 %s16, 1
      %s24 = ssub.s32 %s16, %s23
      %p25 = scmp.eq.s32.totalorder %s24, 0
      %s27 = sadd.s32 %s26, 1
      %s28 = scalar_select %p25, %s26, %s27
      %p31 = pneg %p25
      %p32 = scmp.eq.s32.totalorder %s16, 1
      %p33 = por %p31, %p32
      %p34 = scmp.ne.s32.totalorder %s26, %s29
      %p35 = scmp.eq.s32.totalorder %s16, 0
      %p36 = por %p34, %p35
      %p37 = scmp.ne.s32.totalorder %s26, %s29
      %p38 = scmp.eq.s32.totalorder %s21, 1
      %p39 = por %p37, %p38
      %p40 = scmp.ne.s32.totalorder %s29, %s30
      %p41 = scmp.eq.s32.totalorder %s21, 0
      %p42 = por %p40, %p41
      %p43 = scmp.ne.s32.totalorder %s29, %s30
      %p44 = scmp.eq.s32.totalorder %s22, 1
      %p45 = por %p43, %p44
      %p47 = scmp.ne.s32.totalorder %s30, %s46
      %p48 = scmp.eq.s32.totalorder %s22, 0
      %p49 = por %p47, %p48
      %s50 = ssub.s32 %s16, %s23
      %p51 = scmp.eq.s32.totalorder %s50, 0
      %s53 = sadd.s32 %s52, 1
      %s54 = scalar_select %p51, %s52, %s53
      %p57 = pneg %p51
      %p58 = scmp.eq.s32.totalorder %s16, 1
      %p59 = por %p57, %p58
      %p60 = scmp.ne.s32.totalorder %s52, %s55
      %p61 = scmp.eq.s32.totalorder %s16, 0
      %p62 = por %p60, %p61
      %p63 = scmp.ne.s32.totalorder %s52, %s55
      %p64 = scmp.eq.s32.totalorder %s21, 1
      %p65 = por %p63, %p64
      %p66 = scmp.ne.s32.totalorder %s55, %s56
      %p67 = scmp.eq.s32.totalorder %s21, 0
      %p68 = por %p66, %p67
      %p69 = scmp.ne.s32.totalorder %s55, %s56
      %p70 = scmp.eq.s32.totalorder %s22, 1
      %p71 = por %p69, %p70
      %p73 = scmp.ne.s32.totalorder %s56, %s72
      %p74 = scmp.eq.s32.totalorder %s22, 0
      %p75 = por %p73, %p74
      %s77 = sadd.s32 %s76, 1
      %p80 = scmp.eq.s32.totalorder %s16, 1
      %p81 = scmp.ne.s32.totalorder %s76, %s78
      %p82 = scmp.eq.s32.totalorder %s16, 0
      %p83 = por %p81, %p82
      %p84 = scmp.ne.s32.totalorder %s76, %s78
      %p85 = scmp.eq.s32.totalorder %s21, 1
      %p86 = por %p84, %p85
      %p87 = scmp.ne.s32.totalorder %s78, %s79
      %p88 = scmp.eq.s32.totalorder %s21, 0
      %p89 = por %p87, %p88
      %p90 = scmp.ne.s32.totalorder %s78, %s79
      %p91 = scmp.eq.s32.totalorder %s22, 1
      %p92 = por %p90, %p91
      %p94 = scmp.ne.s32.totalorder %s79, %s93
      %p95 = scmp.eq.s32.totalorder %s22, 0
      %p96 = por %p94, %p95
      %s98 = sadd.s32 %s97, 1
      %p101 = scmp.eq.s32.totalorder %s16, 1
      %p102 = scmp.ne.s32.totalorder %s97, %s99
      %p103 = scmp.eq.s32.totalorder %s16, 0
      %p104 = por %p102, %p103
      %p105 = scmp.ne.s32.totalorder %s97, %s99
      %p106 = scmp.eq.s32.totalorder %s21, 1
      %p107 = por %p105, %p106
      %p108 = scmp.ne.s32.totalorder %s99, %s100
      %p109 = scmp.eq.s32.totalorder %s21, 0
      %p110 = por %p108, %p109
      %p111 = scmp.ne.s32.totalorder %s99, %s100
      %p112 = scmp.eq.s32.totalorder %s22, 1
      %p113 = por %p111, %p112
      %p115 = scmp.ne.s32.totalorder %s100, %s114
      %p116 = scmp.eq.s32.totalorder %s22, 0
      %p117 = por %p115, %p116
      %s119 = sadd.s32 %s118, 1
      %p122 = scmp.eq.s32.totalorder %s16, 1
      %p123 = scmp.ne.s32.totalorder %s118, %s120
      %p124 = scmp.eq.s32.totalorder %s16, 0
      %p125 = por %p123, %p124
      %p126 = scmp.ne.s32.totalorder %s118, %s120
      %p127 = scmp.eq.s32.totalorder %s21, 1
      %p128 = por %p126, %p127
      %p129 = scmp.ne.s32.totalorder %s120, %s121
      %p130 = scmp.eq.s32.totalorder %s21, 0
      %p131 = por %p129, %p130
      %p132 = scmp.ne.s32.totalorder %s120, %s121
      %p133 = scmp.eq.s32.totalorder %s22, 1
      %p134 = por %p132, %p133
      %p136 = scmp.ne.s32.totalorder %s121, %s135
      %p137 = scmp.eq.s32.totalorder %s22, 0
      %p138 = por %p136, %p137
      %s140 = sadd.s32 %s139, 1
      %p143 = scmp.eq.s32.totalorder %s16, 1
      %p144 = scmp.ne.s32.totalorder %s139, %s141
      %p145 = scmp.eq.s32.totalorder %s16, 0
      %p146 = por %p144, %p145
      %p147 = scmp.ne.s32.totalorder %s139, %s141
      %p148 = scmp.eq.s32.totalorder %s21, 1
      %p149 = por %p147, %p148
      %p150 = scmp.ne.s32.totalorder %s141, %s142
      %p151 = scmp.eq.s32.totalorder %s21, 0
      %p152 = por %p150, %p151
      %p153 = scmp.ne.s32.totalorder %s141, %s142
      %p154 = scmp.eq.s32.totalorder %s22, 1
      %p155 = por %p153, %p154
      %p157 = scmp.ne.s32.totalorder %s142, %s156
      %p158 = scmp.eq.s32.totalorder %s22, 0
      %p159 = por %p157, %p158
      %s160 = ssub.s32 %s16, %s23
      %p161 = scmp.eq.s32.totalorder %s160, 0
      %s163 = sadd.s32 %s162, 1
      %s164 = scalar_select %p161, %s162, %s163
      %p167 = pneg %p161
      %p168 = scmp.eq.s32.totalorder %s16, 1
      %p169 = por %p167, %p168
      %p170 = scmp.ne.s32.totalorder %s162, %s165
      %p171 = scmp.eq.s32.totalorder %s16, 0
      %p172 = por %p170, %p171
      %p173 = scmp.ne.s32.totalorder %s162, %s165
      %p174 = scmp.eq.s32.totalorder %s21, 1
      %p175 = por %p173, %p174
      %p176 = scmp.ne.s32.totalorder %s165, %s166
      %p177 = scmp.eq.s32.totalorder %s21, 0
      %p178 = por %p176, %p177
      %p179 = scmp.ne.s32.totalorder %s165, %s166
      %p180 = scmp.eq.s32.totalorder %s22, 1
      %p181 = por %p179, %p180
      %p183 = scmp.ne.s32.totalorder %s166, %s182
      %p184 = scmp.eq.s32.totalorder %s22, 0
      %p185 = por %p183, %p184
      %p186 = scmp.le.s32.totalorder 1, %s16
      %p187 = scmp.lt.s32.totalorder %s16, 3
      %p188 = pnand %p186, %p187
      %p189 = pneg %p188
      // Predicated region
      $region9: #{tpu_custom_call.1} parent=5 // pred_check
        _
      $region10: #{tpu_custom_call.1} parent=5 // pred_check_branch
        %191 = sbr.rel (%p188) target = $region12
      $region11: #{tpu_custom_call.1} parent=5 // pred_region
        %s192 = ssub.s32 %s16, 1
        // Predicated region
        $region13: #{tpu_custom_call.1} parent=11 // pred_check
          %p193 = pneg %p89
        $region14: #{tpu_custom_call.1} parent=11 // pred_check_branch
          %195 = sbr.rel (%p193) target = $region16
        $region15: #{tpu_custom_call.1} parent=11 // pred_region
          _
        $region16: #{tpu_custom_call.1} parent=11 // pred_fallthru
          _
        // Predicated region
        $region17: #{tpu_custom_call.1} parent=11 // pred_check
          %p196 = pneg %p110
        $region18: #{tpu_custom_call.1} parent=11 // pred_check_branch
          %198 = sbr.rel (%p196) target = $region20
        $region19: #{tpu_custom_call.1} parent=11 // pred_region
          _
        $region20: #{tpu_custom_call.1} parent=11 // pred_fallthru
          _
        // Predicated region
        $region21: #{tpu_custom_call.1} parent=11 // pred_check
          %p199 = pneg %p131
        $region22: #{tpu_custom_call.1} parent=11 // pred_check_branch
          %201 = sbr.rel (%p199) target = $region24
        $region23: #{tpu_custom_call.1} parent=11 // pred_region
          %203 = vsyncadd [#allocation3], 0
          %s204 = sshll.u32 %s4, 4
          %s205 = int_to_ptr.hbm [resolvable:$true] %s204
          %s206 = sshll.u32 [#allocation2], 4
          %s207 = int_to_ptr.vmem [resolvable:$true] %s206
          %212 = dma.hbm_to_vmem [thread:$0]  %s205, 5120, %s207, [#allocation3], 64, 64, 4
        $region24: #{tpu_custom_call.1} parent=11 // pred_fallthru
          _
        // Predicated region
        $region25: #{tpu_custom_call.1} parent=11 // pred_check
          %p213 = pneg %p152
        $region26: #{tpu_custom_call.1} parent=11 // pred_check_branch
          %215 = sbr.rel (%p213) target = $region28
        $region27: #{tpu_custom_call.1} parent=11 // pred_region
          _
        $region28: #{tpu_custom_call.1} parent=11 // pred_fallthru
          _
      $region12: #{tpu_custom_call.1} parent=5 // pred_fallthru
        _
      %p216 = scmp.lt.s32.totalorder %s16, 2
      // Predicated region
      $region29: #{tpu_custom_call.1} parent=5 // pred_check
        %p217 = pneg %p216
      $region30: #{tpu_custom_call.1} parent=5 // pred_check_branch
        %219 = sbr.rel (%p217) target = $region32
      $region31: #{tpu_custom_call.1} parent=5 // pred_region
        // Predicated region
        $region33: #{tpu_custom_call.1} parent=31 // pred_check
          %p220 = pneg %p36
        $region34: #{tpu_custom_call.1} parent=31 // pred_check_branch
          %222 = sbr.rel (%p220) target = $region36
        $region35: #{tpu_custom_call.1} parent=31 // pred_region
          %s223 = smul.u32 8, %s16
          %p224 = scmp.lt.s32.totalorder %s223, 15
          %s225 = scalar_select %p224, %s223, 15
          %s226 = smul.addr %s225, 4
          %s227 = scalar_lea.vmem %s0, %s226
          %s228 = smul.u32 8, %s16
        $region36: #{tpu_custom_call.1} parent=31 // pred_fallthru
          _
        // Predicated region
        $region37: #{tpu_custom_call.1} parent=31 // pred_check
          %p229 = pneg %p62
        $region38: #{tpu_custom_call.1} parent=31 // pred_check_branch
          %231 = sbr.rel (%p229) target = $region40
        $region39: #{tpu_custom_call.1} parent=31 // pred_region
          %p232 = scmp.lt.s32.totalorder %s16, 1
          %s233 = scalar_select %p232, %s16, 1
          %s234 = smul.addr %s233, 4
          %s235 = scalar_lea.vmem %s1, %s234
        $region40: #{tpu_custom_call.1} parent=31 // pred_fallthru
          _
      $region32: #{tpu_custom_call.1} parent=5 // pred_fallthru
        _
      %p236 = scmp.le.s32.totalorder 1, %s16
      %p237 = scmp.lt.s32.totalorder %s16, 3
      %p238 = pnand %p236, %p237
      %p239 = pneg %p238
      // Predicated region
      $region41: #{tpu_custom_call.1} parent=5 // pred_check
        _
      $region42: #{tpu_custom_call.1} parent=5 // pred_check_branch
        %241 = sbr.rel (%p238) target = $region44
      $region43: #{tpu_custom_call.1} parent=5 // pred_region
        %s242 = ssub.s32 %s16, 1
        // Predicated region
        $region45: #{tpu_custom_call.1} parent=43 // pred_check
          %p243 = pneg %p131
        $region46: #{tpu_custom_call.1} parent=43 // pred_check_branch
          %245 = sbr.rel (%p243) target = $region48
        $region47: #{tpu_custom_call.1} parent=43 // pred_region
          %247 = dma.done [#allocation3], 5120
        $region48: #{tpu_custom_call.1} parent=43 // pred_fallthru
          _
        %s248 = smul.u32 8, %s21
        %p249 = scmp.lt.s32.totalorder %s248, 15
        %s250 = scalar_select %p249, %s248, 15
        %s251 = smul.addr %s250, 4
        %s252 = scalar_lea.vmem %s0, %s251
        %p253 = pneg %p42
        %p254 = pneg %p39
        %p255 = scmp.lt.s32.totalorder %s21, 1
        %s256 = scalar_select %p255, %s21, 1
        %s257 = smul.addr %s256, 4
        %s258 = scalar_lea.vmem %s1, %s257
        %p259 = pneg %p68
        %p260 = pneg %p65
        %p261 = pneg %p89
        %p262 = pneg %p86
        %p263 = pneg %p110
        %p264 = pneg %p107
        %p265 = pneg %p131
        %p266 = pneg %p128
        %p267 = pneg %p152
        %p268 = pneg %p149
        %p269 = pneg %p178
        %p270 = pneg %p175
        %s271 = sand.u32 %s165, 1
        %s272 = scalar_lea.sflag [#allocation4], %s271
        %s273 = sand.u32 %s165, 1
        %s274 = smul.addr %s273, 8
        %s275 = scalar_lea.vmem [#allocation5], %s274
        %s276 = smul.u32 8, %s21
        %p277 = scmp.lt.s32.totalorder %s276, 15
        %s278 = scalar_select %p277, %s276, 15
        %s279 = smul.addr %s278, 4
        %s280 = scalar_lea.vmem %s0, %s279
        %s281 = smul.u32 8, %s21
        %p282 = scmp.lt.s32.totalorder %s21, 1
        %s283 = scalar_select %p282, %s21, 1
        %s284 = smul.addr %s283, 4
        %s285 = scalar_lea.vmem %s1, %s284
        %v287 = vld [vmem:[%s5] sm:$0xf]
        %v288 = vld [vmem:[%s280] sm:$0xf]
        %v289 = vld [vmem:[%s280 + $0x4] sm:$0xf]
        %v290 = vld [vmem:[%s280 + $0x8] sm:$0xf]
        %v291 = vld [vmem:[%s280 + $0xc] sm:$0xf]
        %v292 = vld [vmem:[%s280 + $0x10] sm:$0xf]
        %v293 = vld [vmem:[%s280 + $0x14] sm:$0xf]
        %v294 = vld [vmem:[%s280 + $0x18] sm:$0xf]
        %v295 = vld [vmem:[%s280 + $0x1c] sm:$0xf]
        %v296 = vld [vmem:[%s2] sm:$0xf]
        %v297 = vld [vmem:[%s2 + $0x4] sm:$0xf]
        %v298 = vperm.slane %v287, 0
        %v307 = vunpack.c.l.b16 %v288
        %v308 = vunpack.c.l.b16 %v289
        %v309 = vunpack.c.l.b16 %v290
        %v310 = vunpack.c.l.b16 %v291
        %v311 = vunpack.c.l.b16 %v292
        %v312 = vunpack.c.l.b16 %v293
        %v313 = vunpack.c.l.b16 %v294
        %v314 = vunpack.c.l.b16 %v295
        %v315 = vpack.c.b16 %v308, %v307
        %v316 = vpack.c.b16 %v310, %v309
        %v317 = vpack.c.b16 %v312, %v311
        %v318 = vpack.c.b16 %v314, %v313
        %v321 = vunpack.c.l.b16 %v296
        %v322 = vunpack.c.l.b16 %v297
        %v323 = vpack.c.b16 %v322, %v321
        %vm325 = vcmask 130048
        %v327 = vsel %vm325, %v315, 0
        %v330 = vsel %vm325, %v316, 0
        %v333 = vsel %vm325, %v317, 0
        %v336 = vsel %vm325, %v318, 0
        %338 = vmatpush.bf16.msra.mxu0 0
        %339 = vmatpush.bf16.msra.mxu0 0
        %340 = vmatpush.bf16.msra.mxu0 0
        %341 = vmatpush.bf16.msra.mxu0 0
        %342 = vmatpush.bf16.msra.mxu0 0
        %343 = vmatpush.bf16.msra.mxu0 0
        %344 = vmatpush.bf16.msra.mxu0 0
        %345 = vmatpush.bf16.msra.mxu0 %v323
        %346 = vmatmul.bf16.gmra.mxu0 %v327
        %v347 = vpop.f32.mrf.mxu0
        %v348 = vadd.f32 %v298, %v347
        %v349 = vpop.f32.mrf.mxu0
        %v350 = vadd.f32 %v298, %v349
        %351 = vmatmul.bf16.gmra.mxu0 %v330
        %v352 = vpop.f32.mrf.mxu0
        %v353 = vadd.f32 %v298, %v352
        %v354 = vpop.f32.mrf.mxu0
        %v355 = vadd.f32 %v298, %v354
        %356 = vmatmul.bf16.gmra.mxu0 %v333
        %v357 = vpop.f32.mrf.mxu0
        %v358 = vadd.f32 %v298, %v357
        %v359 = vpop.f32.mrf.mxu0
        %v360 = vadd.f32 %v298, %v359
        %361 = vmatmul.bf16.gmra.mxu0 %v336
        %v362 = vpop.f32.mrf.mxu0
        %v363 = vadd.f32 %v298, %v362
        %v364 = vpop.f32.mrf.mxu0
        %v365 = vadd.f32 %v298, %v364
        %366 = vdwg.mxu0
        %v367 = vmax.f32 %v348, 0.0
        %v368 = vmax.f32 %v350, 0.0
        %v369 = vmax.f32 %v353, 0.0
        %v370 = vmax.f32 %v355, 0.0
        %v371 = vmax.f32 %v358, 0.0
        %v372 = vmax.f32 %v360, 0.0
        %v373 = vmax.f32 %v363, 0.0
        %v374 = vmax.f32 %v365, 0.0
        %v375 = vld [vmem:[%s285] sm:$0xf]
        %v376 = vld [vmem:[%s3] sm:$0x3]
        %vm377 = vcmask 31744
        %v379 = vsel %vm377, %v375, 0
        %vm381 = vcmask 1041408
        %v383 = vsel %vm381, %v376, 0
        %385 = vmatpush.bf16.msra.mxu0 0
        %386 = vmatpush.bf16.msra.mxu0 0
        %387 = vmatpush.bf16.msra.mxu0 0
        %388 = vmatpush.bf16.msra.mxu0 0
        %389 = vmatpush.bf16.msra.mxu0 0
        %390 = vmatpush.bf16.msra.mxu0 0
        %391 = vmatpush.bf16.msra.mxu0 0
        %392 = vmatpush.bf16.msra.mxu0 %v383
        %393 = vmatmul.bf16.gmra.mxu0 %v379
        %v394 = vpop.f32.mrf.mxu0
        %v395 = vadd.f32 0.0, %v394
        %v396 = vpop.f32.mrf.mxu0
        %397 = vdwg.mxu0
        %v398 = vpack.c.bf16 %v368, %v367
        %v399 = vpack.c.bf16 %v370, %v369
        %v400 = vpack.c.bf16 %v372, %v371
        %v401 = vpack.c.bf16 %v374, %v373
        %v402 = vld [vmem:[#allocation2] sm:$0xf]
        %v403 = vld [vmem:[#allocation2 + $0x4] sm:$0xf]
        %v404 = vld [vmem:[#allocation2 + $0x8] sm:$0xf]
        %v405 = vld [vmem:[#allocation2 + $0xc] sm:$0xf]
        %v406 = vld [vmem:[#allocation2 + $0x10] sm:$0xf]
        %v407 = vld [vmem:[#allocation2 + $0x14] sm:$0xf]
        %v408 = vld [vmem:[#allocation2 + $0x18] sm:$0xf]
        %v409 = vld [vmem:[#allocation2 + $0x1c] sm:$0xf]
        %v410 = vld [vmem:[#allocation2 + $0x20] sm:$0xf]
        %v411 = vld [vmem:[#allocation2 + $0x24] sm:$0xf]
        %v412 = vld [vmem:[#allocation2 + $0x28] sm:$0xf]
        %v413 = vld [vmem:[#allocation2 + $0x2c] sm:$0xf]
        %v414 = vld [vmem:[#allocation2 + $0x30] sm:$0xf]
        %v415 = vld [vmem:[#allocation2 + $0x34] sm:$0xf]
        %v416 = vld [vmem:[#allocation2 + $0x38] sm:$0xf]
        %v417 = vld [vmem:[#allocation2 + $0x3c] sm:$0xf]
        %v434 = vunpack.c.l.b16 %v402
        %v435 = vunpack.c.l.b16 %v403
        %v436 = vunpack.c.l.b16 %v404
        %v437 = vunpack.c.l.b16 %v405
        %v438 = vunpack.c.l.b16 %v406
        %v439 = vunpack.c.l.b16 %v407
        %v440 = vunpack.c.l.b16 %v408
        %v441 = vunpack.c.l.b16 %v409
        %v442 = vunpack.c.l.b16 %v410
        %v443 = vunpack.c.l.b16 %v411
        %v444 = vunpack.c.l.b16 %v412
        %v445 = vunpack.c.l.b16 %v413
        %v446 = vunpack.c.l.b16 %v414
        %v447 = vunpack.c.l.b16 %v415
        %v448 = vunpack.c.l.b16 %v416
        %v449 = vunpack.c.l.b16 %v417
        %v450 = vpack.c.b16 %v435, %v434
        %v451 = vpack.c.b16 %v437, %v436
        %v452 = vpack.c.b16 %v439, %v438
        %v453 = vpack.c.b16 %v441, %v440
        %v454 = vpack.c.b16 %v443, %v442
        %v455 = vpack.c.b16 %v445, %v444
        %v456 = vpack.c.b16 %v447, %v446
        %v457 = vpack.c.b16 %v449, %v448
        %466 = vmatpush.bf16.msra.mxu0 %v457
        %467 = vmatpush.bf16.msra.mxu0 %v456
        %468 = vmatpush.bf16.msra.mxu0 %v455
        %469 = vmatpush.bf16.msra.mxu0 %v454
        %470 = vmatpush.bf16.msra.mxu0 %v453
        %471 = vmatpush.bf16.msra.mxu0 %v452
        %472 = vmatpush.bf16.msra.mxu0 %v451
        %473 = vmatpush.bf16.msra.mxu0 %v450
        %474 = vmatmul.bf16.gmra.mxu0 %v398
        %v475 = vpop.f32.mrf.mxu0
        %v476 = vadd.f32 0.0, %v475
        %v477 = vpop.f32.mrf.mxu0
        %v478 = vadd.f32 0.0, %v477
        %479 = vmatmul.bf16.gmra.mxu0 %v399
        %v480 = vpop.f32.mrf.mxu0
        %v481 = vadd.f32 0.0, %v480
        %v482 = vpop.f32.mrf.mxu0
        %v483 = vadd.f32 0.0, %v482
        %484 = vmatmul.bf16.gmra.mxu0 %v400
        %v485 = vpop.f32.mrf.mxu0
        %v486 = vadd.f32 0.0, %v485
        %v487 = vpop.f32.mrf.mxu0
        %v488 = vadd.f32 0.0, %v487
        %489 = vmatmul.bf16.gmra.mxu0 %v401
        %v490 = vpop.f32.mrf.mxu0
        %v491 = vadd.f32 0.0, %v490
        %v492 = vpop.f32.mrf.mxu0
        %v493 = vadd.f32 0.0, %v492
        %494 = vdwg.mxu0
        %v496 = vrot.slane %v395, 1
        %v497 = vrot.slane %v395, 2
        %v498 = vrot.slane %v395, 3
        %v499 = vrot.slane %v395, 4
        %v500 = vrot.slane %v395, 5
        %v501 = vrot.slane %v395, 6
        %v502 = vrot.slane %v395, 7
        %v503 = vperm.slane %v395, 0
        %v504 = vperm.slane %v496, 0
        %v505 = vperm.slane %v497, 0
        %v506 = vperm.slane %v498, 0
        %v507 = vperm.slane %v499, 0
        %v508 = vperm.slane %v500, 0
        %v509 = vperm.slane %v501, 0
        %v510 = vperm.slane %v502, 0
        %v519 = vadd.f32 %v476, %v503
        %v520 = vadd.f32 %v478, %v504
        %v521 = vadd.f32 %v481, %v505
        %v522 = vadd.f32 %v483, %v506
        %v523 = vadd.f32 %v486, %v507
        %v524 = vadd.f32 %v488, %v508
        %v525 = vadd.f32 %v491, %v509
        %v526 = vadd.f32 %v493, %v510
        %v527 = vperm.slane %v287, 1
        %v528 = vadd.f32 %v519, %v527
        %v529 = vadd.f32 %v520, %v527
        %v530 = vadd.f32 %v521, %v527
        %v531 = vadd.f32 %v522, %v527
        %v532 = vadd.f32 %v523, %v527
        %v533 = vadd.f32 %v524, %v527
        %v534 = vadd.f32 %v525, %v527
        %v535 = vadd.f32 %v526, %v527
        %v536 = vmax.f32 %v528, 0.0
        %v537 = vmax.f32 %v529, 0.0
        %v538 = vmax.f32 %v530, 0.0
        %v539 = vmax.f32 %v531, 0.0
        %v540 = vmax.f32 %v532, 0.0
        %v541 = vmax.f32 %v533, 0.0
        %v542 = vmax.f32 %v534, 0.0
        %v543 = vmax.f32 %v535, 0.0
        %v544 = vrot.slane %v536, 4
        %v545 = vadd.f32 %v536, %v544
        %v546 = vrot.slane %v545, 2
        %v547 = vadd.f32 %v545, %v546
        %v548 = vrot.slane %v547, 1
        %v549 = vadd.f32 %v547, %v548
        %v550 = vrot.slane %v537, 4
        %v551 = vadd.f32 %v537, %v550
        %v552 = vrot.slane %v551, 2
        %v553 = vadd.f32 %v551, %v552
        %v554 = vrot.slane %v553, 1
        %v555 = vadd.f32 %v553, %v554
        %v556 = vrot.slane %v538, 4
        %v557 = vadd.f32 %v538, %v556
        %v558 = vrot.slane %v557, 2
        %v559 = vadd.f32 %v557, %v558
        %v560 = vrot.slane %v559, 1
        %v561 = vadd.f32 %v559, %v560
        %v562 = vrot.slane %v539, 4
        %v563 = vadd.f32 %v539, %v562
        %v564 = vrot.slane %v563, 2
        %v565 = vadd.f32 %v563, %v564
        %v566 = vrot.slane %v565, 1
        %v567 = vadd.f32 %v565, %v566
        %v568 = vrot.slane %v540, 4
        %v569 = vadd.f32 %v540, %v568
        %v570 = vrot.slane %v569, 2
        %v571 = vadd.f32 %v569, %v570
        %v572 = vrot.slane %v571, 1
        %v573 = vadd.f32 %v571, %v572
        %v574 = vrot.slane %v541, 4
        %v575 = vadd.f32 %v541, %v574
        %v576 = vrot.slane %v575, 2
        %v577 = vadd.f32 %v575, %v576
        %v578 = vrot.slane %v577, 1
        %v579 = vadd.f32 %v577, %v578
        %v580 = vrot.slane %v542, 4
        %v581 = vadd.f32 %v542, %v580
        %v582 = vrot.slane %v581, 2
        %v583 = vadd.f32 %v581, %v582
        %v584 = vrot.slane %v583, 1
        %v585 = vadd.f32 %v583, %v584
        %v586 = vrot.slane %v543, 4
        %v587 = vadd.f32 %v543, %v586
        %v588 = vrot.slane %v587, 2
        %v589 = vadd.f32 %v587, %v588
        %v590 = vrot.slane %v589, 1
        %v591 = vadd.f32 %v589, %v590
        %v592 = vmul.f32 %v549, 0.125
        %v593 = vmul.f32 %v555, 0.125
        %v594 = vmul.f32 %v561, 0.125
        %v595 = vmul.f32 %v567, 0.125
        %v596 = vmul.f32 %v573, 0.125
        %v597 = vmul.f32 %v579, 0.125
        %v598 = vmul.f32 %v585, 0.125
        %v599 = vmul.f32 %v591, 0.125
        %v600 = vrot.slane %v536, 4
        %v601 = vmax.f32 %v536, %v600
        %v602 = vrot.slane %v601, 2
        %v603 = vmax.f32 %v601, %v602
        %v604 = vrot.slane %v603, 1
        %v605 = vmax.f32 %v603, %v604
        %v606 = vrot.slane %v537, 4
        %v607 = vmax.f32 %v537, %v606
        %v608 = vrot.slane %v607, 2
        %v609 = vmax.f32 %v607, %v608
        %v610 = vrot.slane %v609, 1
        %v611 = vmax.f32 %v609, %v610
        %v612 = vrot.slane %v538, 4
        %v613 = vmax.f32 %v538, %v612
        %v614 = vrot.slane %v613, 2
        %v615 = vmax.f32 %v613, %v614
        %v616 = vrot.slane %v615, 1
        %v617 = vmax.f32 %v615, %v616
        %v618 = vrot.slane %v539, 4
        %v619 = vmax.f32 %v539, %v618
        %v620 = vrot.slane %v619, 2
        %v621 = vmax.f32 %v619, %v620
        %v622 = vrot.slane %v621, 1
        %v623 = vmax.f32 %v621, %v622
        %v624 = vrot.slane %v540, 4
        %v625 = vmax.f32 %v540, %v624
        %v626 = vrot.slane %v625, 2
        %v627 = vmax.f32 %v625, %v626
        %v628 = vrot.slane %v627, 1
        %v629 = vmax.f32 %v627, %v628
        %v630 = vrot.slane %v541, 4
        %v631 = vmax.f32 %v541, %v630
        %v632 = vrot.slane %v631, 2
        %v633 = vmax.f32 %v631, %v632
        %v634 = vrot.slane %v633, 1
        %v635 = vmax.f32 %v633, %v634
        %v636 = vrot.slane %v542, 4
        %v637 = vmax.f32 %v542, %v636
        %v638 = vrot.slane %v637, 2
        %v639 = vmax.f32 %v637, %v638
        %v640 = vrot.slane %v639, 1
        %v641 = vmax.f32 %v639, %v640
        %v642 = vrot.slane %v543, 4
        %v643 = vmax.f32 %v543, %v642
        %v644 = vrot.slane %v643, 2
        %v645 = vmax.f32 %v643, %v644
        %v646 = vrot.slane %v645, 1
        %v647 = vmax.f32 %v645, %v646
        %v648 = vpack.c.bf16 %v536, %v536
        %v649 = vpack.c.bf16 %v537, %v537
        %v650 = vpack.c.bf16 %v538, %v538
        %v651 = vpack.c.bf16 %v539, %v539
        %v652 = vpack.c.bf16 %v540, %v540
        %v653 = vpack.c.bf16 %v541, %v541
        %v654 = vpack.c.bf16 %v542, %v542
        %v655 = vpack.c.bf16 %v543, %v543
        %s656 = scalar_lea.vmem [#allocation2], 64
        %v657 = vld [vmem:[%s656] sm:$0xf]
        %v658 = vld [vmem:[%s656 + $0x4] sm:$0xf]
        %v659 = vld [vmem:[%s656 + $0x8] sm:$0xf]
        %v660 = vld [vmem:[%s656 + $0xc] sm:$0xf]
        %v661 = vld [vmem:[%s656 + $0x10] sm:$0xf]
        %v662 = vld [vmem:[%s656 + $0x14] sm:$0xf]
        %v663 = vld [vmem:[%s656 + $0x18] sm:$0xf]
        %v664 = vld [vmem:[%s656 + $0x1c] sm:$0xf]
        %v665 = vld [vmem:[%s656 + $0x20] sm:$0xf]
        %v666 = vld [vmem:[%s656 + $0x24] sm:$0xf]
        %v667 = vld [vmem:[%s656 + $0x28] sm:$0xf]
        %v668 = vld [vmem:[%s656 + $0x2c] sm:$0xf]
        %v669 = vld [vmem:[%s656 + $0x30] sm:$0xf]
        %v670 = vld [vmem:[%s656 + $0x34] sm:$0xf]
        %v671 = vld [vmem:[%s656 + $0x38] sm:$0xf]
        %v672 = vld [vmem:[%s656 + $0x3c] sm:$0xf]
        %v673 = vpack.c.bf16 %v592, %v592
        %v674 = vpack.c.bf16 %v593, %v593
        %v675 = vpack.c.bf16 %v594, %v594
        %v676 = vpack.c.bf16 %v595, %v595
        %v677 = vpack.c.bf16 %v596, %v596
        %v678 = vpack.c.bf16 %v597, %v597
        %v679 = vpack.c.bf16 %v598, %v598
        %v680 = vpack.c.bf16 %v599, %v599
        %s681 = scalar_lea.vmem [#allocation2], 128
        %v682 = vld [vmem:[%s681] sm:$0xf]
        %v683 = vld [vmem:[%s681 + $0x4] sm:$0xf]
        %v684 = vld [vmem:[%s681 + $0x8] sm:$0xf]
        %v685 = vld [vmem:[%s681 + $0xc] sm:$0xf]
        %v686 = vld [vmem:[%s681 + $0x10] sm:$0xf]
        %v687 = vld [vmem:[%s681 + $0x14] sm:$0xf]
        %v688 = vld [vmem:[%s681 + $0x18] sm:$0xf]
        %v689 = vld [vmem:[%s681 + $0x1c] sm:$0xf]
        %v690 = vld [vmem:[%s681 + $0x20] sm:$0xf]
        %v691 = vld [vmem:[%s681 + $0x24] sm:$0xf]
        %v692 = vld [vmem:[%s681 + $0x28] sm:$0xf]
        %v693 = vld [vmem:[%s681 + $0x2c] sm:$0xf]
        %v694 = vld [vmem:[%s681 + $0x30] sm:$0xf]
        %v695 = vld [vmem:[%s681 + $0x34] sm:$0xf]
        %v696 = vld [vmem:[%s681 + $0x38] sm:$0xf]
        %v697 = vld [vmem:[%s681 + $0x3c] sm:$0xf]
        %v706 = vunpack.c.l.b16 %v673
        %v707 = vunpack.c.l.b16 %v674
        %v708 = vunpack.c.l.b16 %v675
        %v709 = vunpack.c.l.b16 %v676
        %v710 = vunpack.c.l.b16 %v677
        %v711 = vunpack.c.l.b16 %v678
        %v712 = vunpack.c.l.b16 %v679
        %v713 = vunpack.c.l.b16 %v680
        %vm714 = vcmask 1041409
        %v715 = vsel %vm714, %v707, %v706
        %vm716 = vcmask 1042434
        %v717 = vsel %vm716, %v708, %v715
        %vm718 = vcmask 1043459
        %v719 = vsel %vm718, %v709, %v717
        %vm720 = vcmask 1044484
        %v721 = vsel %vm720, %v710, %v719
        %vm722 = vcmask 1045509
        %v723 = vsel %vm722, %v711, %v721
        %vm724 = vcmask 1046534
        %v725 = vsel %vm724, %v712, %v723
        %vm726 = vcmask 1047559
        %v727 = vsel %vm726, %v713, %v725
        %v728 = vpack.c.b16 %v727, %v727
        %v746 = vunpack.c.l.b16 %v682
        %v747 = vunpack.c.l.b16 %v683
        %v748 = vunpack.c.l.b16 %v684
        %v749 = vunpack.c.l.b16 %v685
        %v750 = vunpack.c.l.b16 %v686
        %v751 = vunpack.c.l.b16 %v687
        %v752 = vunpack.c.l.b16 %v688
        %v753 = vunpack.c.l.b16 %v689
        %v754 = vunpack.c.l.b16 %v690
        %v755 = vunpack.c.l.b16 %v691
        %v756 = vunpack.c.l.b16 %v692
        %v757 = vunpack.c.l.b16 %v693
        %v758 = vunpack.c.l.b16 %v694
        %v759 = vunpack.c.l.b16 %v695
        %v760 = vunpack.c.l.b16 %v696
        %v761 = vunpack.c.l.b16 %v697
        %v762 = vpack.c.b16 %v747, %v746
        %v763 = vpack.c.b16 %v749, %v748
        %v764 = vpack.c.b16 %v751, %v750
        %v765 = vpack.c.b16 %v753, %v752
        %v766 = vpack.c.b16 %v755, %v754
        %v767 = vpack.c.b16 %v757, %v756
        %v768 = vpack.c.b16 %v759, %v758
        %v769 = vpack.c.b16 %v761, %v760
        %778 = vmatpush.bf16.msra.mxu0 %v769
        %779 = vmatpush.bf16.msra.mxu0 %v768
        %780 = vmatpush.bf16.msra.mxu0 %v767
        %781 = vmatpush.bf16.msra.mxu0 %v766
        %782 = vmatpush.bf16.msra.mxu0 %v765
        %783 = vmatpush.bf16.msra.mxu0 %v764
        %784 = vmatpush.bf16.msra.mxu0 %v763
        %785 = vmatpush.bf16.msra.mxu0 %v762
        %786 = vmatmul.bf16.gmra.mxu0 %v728
        %v787 = vpop.f32.mrf.mxu0
        %v788 = vadd.f32 0.0, %v787
        %v789 = vpop.f32.mrf.mxu0
        %790 = vdwg.mxu0
        %v799 = vunpack.c.l.b16 %v648
        %v800 = vunpack.c.l.b16 %v649
        %v801 = vunpack.c.l.b16 %v650
        %v802 = vunpack.c.l.b16 %v651
        %v803 = vunpack.c.l.b16 %v652
        %v804 = vunpack.c.l.b16 %v653
        %v805 = vunpack.c.l.b16 %v654
        %v806 = vunpack.c.l.b16 %v655
        %v807 = vrot.slane %v799, 7
        %v808 = vrot.slane %v800, 6
        %v809 = vsel %vm714, %v808, %v807
        %v810 = vrot.slane %v801, 5
        %v811 = vsel %vm716, %v810, %v809
        %v812 = vrot.slane %v802, 4
        %v813 = vsel %vm718, %v812, %v811
        %v814 = vrot.slane %v803, 3
        %v815 = vsel %vm720, %v814, %v813
        %v816 = vrot.slane %v804, 2
        %v817 = vsel %vm722, %v816, %v815
        %v818 = vrot.slane %v805, 1
        %v819 = vsel %vm724, %v818, %v817
        %v820 = vsel %vm726, %v806, %v819
        %v821 = vpack.c.b16 %v820, %v820
        %v839 = vunpack.c.l.b16 %v657
        %v840 = vunpack.c.l.b16 %v658
        %v841 = vunpack.c.l.b16 %v659
        %v842 = vunpack.c.l.b16 %v660
        %v843 = vunpack.c.l.b16 %v661
        %v844 = vunpack.c.l.b16 %v662
        %v845 = vunpack.c.l.b16 %v663
        %v846 = vunpack.c.l.b16 %v664
        %v847 = vunpack.c.l.b16 %v665
        %v848 = vunpack.c.l.b16 %v666
        %v849 = vunpack.c.l.b16 %v667
        %v850 = vunpack.c.l.b16 %v668
        %v851 = vunpack.c.l.b16 %v669
        %v852 = vunpack.c.l.b16 %v670
        %v853 = vunpack.c.l.b16 %v671
        %v854 = vunpack.c.l.b16 %v672
        %v855 = vpack.c.b16 %v840, %v839
        %v856 = vpack.c.b16 %v842, %v841
        %v857 = vpack.c.b16 %v844, %v843
        %v858 = vpack.c.b16 %v846, %v845
        %v859 = vpack.c.b16 %v848, %v847
        %v860 = vpack.c.b16 %v850, %v849
        %v861 = vpack.c.b16 %v852, %v851
        %v862 = vpack.c.b16 %v854, %v853
        %871 = vmatpush.bf16.msra.mxu0 %v862
        %872 = vmatpush.bf16.msra.mxu0 %v861
        %873 = vmatpush.bf16.msra.mxu0 %v860
        %874 = vmatpush.bf16.msra.mxu0 %v859
        %875 = vmatpush.bf16.msra.mxu0 %v858
        %876 = vmatpush.bf16.msra.mxu0 %v857
        %877 = vmatpush.bf16.msra.mxu0 %v856
        %878 = vmatpush.bf16.msra.mxu0 %v855
        %879 = vmatmul.bf16.gmra.mxu0 %v821
        %v880 = vpop.f32.mrf.mxu0
        %v881 = vadd.f32 %v788, %v880
        %v882 = vpop.f32.mrf.mxu0
        %883 = vdwg.mxu0
        %v884 = vpack.c.bf16 %v605, %v605
        %v885 = vpack.c.bf16 %v611, %v611
        %v886 = vpack.c.bf16 %v617, %v617
        %v887 = vpack.c.bf16 %v623, %v623
        %v888 = vpack.c.bf16 %v629, %v629
        %v889 = vpack.c.bf16 %v635, %v635
        %v890 = vpack.c.bf16 %v641, %v641
        %v891 = vpack.c.bf16 %v647, %v647
        %s892 = scalar_lea.vmem [#allocation2], 192
        %v893 = vld [vmem:[%s892] sm:$0xf]
        %v894 = vld [vmem:[%s892 + $0x4] sm:$0xf]
        %v895 = vld [vmem:[%s892 + $0x8] sm:$0xf]
        %v896 = vld [vmem:[%s892 + $0xc] sm:$0xf]
        %v897 = vld [vmem:[%s892 + $0x10] sm:$0xf]
        %v898 = vld [vmem:[%s892 + $0x14] sm:$0xf]
        %v899 = vld [vmem:[%s892 + $0x18] sm:$0xf]
        %v900 = vld [vmem:[%s892 + $0x1c] sm:$0xf]
        %v901 = vld [vmem:[%s892 + $0x20] sm:$0xf]
        %v902 = vld [vmem:[%s892 + $0x24] sm:$0xf]
        %v903 = vld [vmem:[%s892 + $0x28] sm:$0xf]
        %v904 = vld [vmem:[%s892 + $0x2c] sm:$0xf]
        %v905 = vld [vmem:[%s892 + $0x30] sm:$0xf]
        %v906 = vld [vmem:[%s892 + $0x34] sm:$0xf]
        %v907 = vld [vmem:[%s892 + $0x38] sm:$0xf]
        %v908 = vld [vmem:[%s892 + $0x3c] sm:$0xf]
        %v917 = vunpack.c.l.b16 %v884
        %v918 = vunpack.c.l.b16 %v885
        %v919 = vunpack.c.l.b16 %v886
        %v920 = vunpack.c.l.b16 %v887
        %v921 = vunpack.c.l.b16 %v888
        %v922 = vunpack.c.l.b16 %v889
        %v923 = vunpack.c.l.b16 %v890
        %v924 = vunpack.c.l.b16 %v891
        %v925 = vsel %vm714, %v918, %v917
        %v926 = vsel %vm716, %v919, %v925
        %v927 = vsel %vm718, %v920, %v926
        %v928 = vsel %vm720, %v921, %v927
        %v929 = vsel %vm722, %v922, %v928
        %v930 = vsel %vm724, %v923, %v929
        %v931 = vsel %vm726, %v924, %v930
        %v932 = vpack.c.b16 %v931, %v931
        %v950 = vunpack.c.l.b16 %v893
        %v951 = vunpack.c.l.b16 %v894
        %v952 = vunpack.c.l.b16 %v895
        %v953 = vunpack.c.l.b16 %v896
        %v954 = vunpack.c.l.b16 %v897
        %v955 = vunpack.c.l.b16 %v898
        %v956 = vunpack.c.l.b16 %v899
        %v957 = vunpack.c.l.b16 %v900
        %v958 = vunpack.c.l.b16 %v901
        %v959 = vunpack.c.l.b16 %v902
        %v960 = vunpack.c.l.b16 %v903
        %v961 = vunpack.c.l.b16 %v904
        %v962 = vunpack.c.l.b16 %v905
        %v963 = vunpack.c.l.b16 %v906
        %v964 = vunpack.c.l.b16 %v907
        %v965 = vunpack.c.l.b16 %v908
        %v966 = vpack.c.b16 %v951, %v950
        %v967 = vpack.c.b16 %v953, %v952
        %v968 = vpack.c.b16 %v955, %v954
        %v969 = vpack.c.b16 %v957, %v956
        %v970 = vpack.c.b16 %v959, %v958
        %v971 = vpack.c.b16 %v961, %v960
        %v972 = vpack.c.b16 %v963, %v962
        %v973 = vpack.c.b16 %v965, %v964
        %982 = vmatpush.bf16.msra.mxu0 %v973
        %983 = vmatpush.bf16.msra.mxu0 %v972
        %984 = vmatpush.bf16.msra.mxu0 %v971
        %985 = vmatpush.bf16.msra.mxu0 %v970
        %986 = vmatpush.bf16.msra.mxu0 %v969
        %987 = vmatpush.bf16.msra.mxu0 %v968
        %988 = vmatpush.bf16.msra.mxu0 %v967
        %989 = vmatpush.bf16.msra.mxu0 %v966
        %990 = vmatmul.bf16.gmra.mxu0 %v932
        %v991 = vpop.f32.mrf.mxu0
        %v992 = vadd.f32 0.0, %v991
        %v993 = vpop.f32.mrf.mxu0
        %994 = vdwg.mxu0
        %v995 = vadd.f32 %v881, %v992
        %v996 = vperm.slane %v287, 2
        %v997 = vadd.f32 %v995, %v996
        %v998 = vmax.f32 %v997, 0.0
        %v999 = vpack.c.bf16 %v998, %v998
        %s1000 = scalar_lea.vmem [#allocation2], 256
        %v1001 = vld [vmem:[%s1000] sm:$0xf]
        %v1002 = vld [vmem:[%s1000 + $0x4] sm:$0xf]
        %v1003 = vld [vmem:[%s1000 + $0x8] sm:$0xf]
        %v1004 = vld [vmem:[%s1000 + $0xc] sm:$0xf]
        %v1005 = vld [vmem:[%s1000 + $0x10] sm:$0xf]
        %v1006 = vld [vmem:[%s1000 + $0x14] sm:$0xf]
        %v1007 = vld [vmem:[%s1000 + $0x18] sm:$0xf]
        %v1008 = vld [vmem:[%s1000 + $0x1c] sm:$0xf]
        %v1009 = vld [vmem:[%s1000 + $0x20] sm:$0xf]
        %v1010 = vld [vmem:[%s1000 + $0x24] sm:$0xf]
        %v1011 = vld [vmem:[%s1000 + $0x28] sm:$0xf]
        %v1012 = vld [vmem:[%s1000 + $0x2c] sm:$0xf]
        %v1013 = vld [vmem:[%s1000 + $0x30] sm:$0xf]
        %v1014 = vld [vmem:[%s1000 + $0x34] sm:$0xf]
        %v1015 = vld [vmem:[%s1000 + $0x38] sm:$0xf]
        %v1016 = vld [vmem:[%s1000 + $0x3c] sm:$0xf]
        %v1017 = vperm.slane %v287, 3
        %v1034 = vunpack.c.l.b16 %v1001
        %v1035 = vunpack.c.l.b16 %v1002
        %v1036 = vunpack.c.l.b16 %v1003
        %v1037 = vunpack.c.l.b16 %v1004
        %v1038 = vunpack.c.l.b16 %v1005
        %v1039 = vunpack.c.l.b16 %v1006
        %v1040 = vunpack.c.l.b16 %v1007
        %v1041 = vunpack.c.l.b16 %v1008
        %v1042 = vunpack.c.l.b16 %v1009
        %v1043 = vunpack.c.l.b16 %v1010
        %v1044 = vunpack.c.l.b16 %v1011
        %v1045 = vunpack.c.l.b16 %v1012
        %v1046 = vunpack.c.l.b16 %v1013
        %v1047 = vunpack.c.l.b16 %v1014
        %v1048 = vunpack.c.l.b16 %v1015
        %v1049 = vunpack.c.l.b16 %v1016
        %v1050 = vpack.c.b16 %v1035, %v1034
        %v1051 = vpack.c.b16 %v1037, %v1036
        %v1052 = vpack.c.b16 %v1039, %v1038
        %v1053 = vpack.c.b16 %v1041, %v1040
        %v1054 = vpack.c.b16 %v1043, %v1042
        %v1055 = vpack.c.b16 %v1045, %v1044
        %v1056 = vpack.c.b16 %v1047, %v1046
        %v1057 = vpack.c.b16 %v1049, %v1048
        %1066 = vmatpush.bf16.msra.mxu0 %v1057
        %1067 = vmatpush.bf16.msra.mxu0 %v1056
        %1068 = vmatpush.bf16.msra.mxu0 %v1055
        %1069 = vmatpush.bf16.msra.mxu0 %v1054
        %1070 = vmatpush.bf16.msra.mxu0 %v1053
        %1071 = vmatpush.bf16.msra.mxu0 %v1052
        %1072 = vmatpush.bf16.msra.mxu0 %v1051
        %1073 = vmatpush.bf16.msra.mxu0 %v1050
        %1074 = vmatmul.bf16.gmra.mxu0 %v999
        %v1075 = vpop.f32.mrf.mxu0
        %v1076 = vadd.f32 %v1017, %v1075
        %v1077 = vpop.f32.mrf.mxu0
        %1078 = vdwg.mxu0
        %1079 = vst [vmem:[%s275] sm:$0xff] %v1076
        %s1080 = sand.u32 %s165, 1
        %s1081 = scalar_lea.sflag [#allocation4], %s1080
        %s1082 = sand.u32 %s165, 1
        %s1083 = smul.addr %s1082, 8
        %s1084 = scalar_lea.vmem [#allocation5], %s1083
        // Predicated region
        $region49: #{tpu_custom_call.1} parent=43 // pred_check
          %p1085 = pneg %p175
        $region50: #{tpu_custom_call.1} parent=43 // pred_check_branch
          %1087 = sbr.rel (%p1085) target = $region52
        $region51: #{tpu_custom_call.1} parent=43 // pred_region
          %1089 = vsyncadd %s1081, 0
          %s1090 = smul.addr %s21, 8
          %s1091 = scalar_lea.hbm %s6, %s1090
          %s1093 = sshll.u32 %s1084, 4
          %s1094 = int_to_ptr.vmem [resolvable:$true] %s1093
          %s1095 = sshll.u32 %s1091, 4
          %s1096 = int_to_ptr.hbm [resolvable:$true] %s1095
          %1098 = dma.vmem_to_hbm [thread:$0]  %s1094, 128, %s1096, %s1081
        $region52: #{tpu_custom_call.1} parent=43 // pred_fallthru
          _
      $region44: #{tpu_custom_call.1} parent=5 // pred_fallthru
        _
      %p1099 = scmp.le.s32.totalorder 2, %s16
      // Predicated region
      $region53: #{tpu_custom_call.1} parent=5 // pred_check
        %p1100 = pneg %p1099
      $region54: #{tpu_custom_call.1} parent=5 // pred_check_branch
        %1102 = sbr.rel (%p1100) target = $region56
      $region55: #{tpu_custom_call.1} parent=5 // pred_region
        %s1103 = ssub.s32 %s16, 2
        // Predicated region
        $region57: #{tpu_custom_call.1} parent=55 // pred_check
          %p1104 = pneg %p181
        $region58: #{tpu_custom_call.1} parent=55 // pred_check_branch
          %1106 = sbr.rel (%p1104) target = $region60
        $region59: #{tpu_custom_call.1} parent=55 // pred_region
          %s1107 = sand.u32 %s166, 1
          %s1108 = scalar_lea.sflag [#allocation4], %s1107
          %s1109 = sand.u32 %s166, 1
          %s1110 = smul.addr %s1109, 8
          %s1111 = scalar_lea.vmem [#allocation5], %s1110
          %1113 = dma.done %s1108, 128
        $region60: #{tpu_custom_call.1} parent=55 // pred_fallthru
          _
      $region56: #{tpu_custom_call.1} parent=5 // pred_fallthru
        _
    $region6: #{tpu_custom_call.1} parent=1 // loop_footer
      %s20 = sadd.s32 1, %s16
    $region7: #{tpu_custom_call.1} parent=1 // loop_footer_branch
      %15 = sbr.rel target = $region3
    $region8: #{tpu_custom_call.1} parent=1 // loop_exit
      _
    %1114 = vsyncpa [#allocation3], 1
    %s1115 = scalar_lea.sflag [#allocation3], 1
    %1116 = vsyncpa %s1115, 1
    %1117 = vsyncpa [#allocation4], 1
    %s1118 = scalar_lea.sflag [#allocation4], 1
    %1119 = vsyncpa %s1118, 1

</llo_original>
